<compile_context>
chip_gen: v5e
topology: v5e:2x2
jax: 0.10.0
libtpu: 0.0.40
codegen_flags: <defaults>
</compile_context>

<pallas_src>
import jax
import jax.numpy as jnp
from jax import lax
from jax.experimental import pallas as pl
from jax.experimental.pallas import tpu as pltpu

EPS = 1e-5
_HIGHEST = jax.lax.Precision.HIGHEST  # reference conv only


def make_resnet_block_kernel(N, H, W, C):
    R = N * H          # rows of the lane-dense slab
    WC = W * C         # lanes
    inv_count = 1.0 / float(N * H * W)

    def lane_channel_sum(v):
        # Per-channel totals (channel = lane % C), broadcast back to every lane,
        # via circular lane rolls on the XLU -- exact f32, zero MXU work.
        if W & (W - 1) == 0:               # log-step reduction for power-of-two W
            s = v
            shift = C
            while shift < WC:
                s = s + pltpu.roll(s, shift, axis=1)
                shift *= 2
            return s
        s = v                               # general fallback: W-1 single rolls
        for k in range(1, W):
            s = s + pltpu.roll(v, k * C, axis=1)
        return s

    def kernel(x_ref, wb1_ref, wb2_ref, g1_ref, b1_ref, g2_ref, b2_ref, o_ref):
        x = x_ref[...]                      # (R, WC) f32, lane-dense activation

        # (R, 1) boundary masks for the dy = -1 / +1 taps; lanes broadcast inside
        # jnp.where (zero padding at image top/bottom, and masks the circular
        # wrap-around between batch images).
        row = lax.broadcasted_iota(jnp.int32, (R, 1), 0)
        not_top = (row % H) != 0
        not_bot = (row % H) != (H - 1)

        def conv3x3(a, wb_ref):
            # dy shifts: sublane roll (XLU) + boundary mask, in f32.  dx taps,
            # Cin->Cout contraction and W-direction zero padding live inside the
            # block-banded weights.  The three dy matmuls are fused into one
            # K = 3*WC single-pass bf16 MXU matmul with f32 accumulation.
            up = jnp.where(not_top, pltpu.roll(a, 1, axis=0), 0.0)        # y-1
            down = jnp.where(not_bot, pltpu.roll(a, R - 1, axis=0), 0.0)  # y+1
            shifted = jnp.concatenate([up, a, down], axis=1).astype(jnp.bfloat16)
            return jnp.dot(shifted, wb_ref[...],
                           preferred_element_type=jnp.float32)

        def batchnorm(y, gamma_lane, beta_lane):
            # Training-mode batch stats over (N, H, W) per channel, one-pass
            # (sum, sum of squares), reduced off-MXU with lane rolls.  Stats and
            # the folded affine stay in f32.
            col = jnp.sum(y, axis=0, keepdims=True)            # (1, WC) row sums
            colsq = jnp.sum(y * y, axis=0, keepdims=True)      # (1, WC)
            mean = lane_channel_sum(col) * inv_count
            meansq = lane_channel_sum(colsq) * inv_count
            var = meansq - mean * mean
            scale = gamma_lane * lax.rsqrt(var + EPS)          # folded affine
            shift = beta_lane - mean * scale
            return y * scale + shift

        h = conv3x3(x, wb1_ref)                                       # conv1
        h = jnp.maximum(batchnorm(h, g1_ref[...], b1_ref[...]), 0.0)  # norm1+relu1
        h = conv3x3(h, wb2_ref)                                       # conv2
        h = batchnorm(h, g2_ref[...], b2_ref[...])                    # norm2
        o_ref[...] = jnp.maximum(h + x, 0.0).astype(o_ref.dtype)      # +id, relu2

    return kernel


def _band_weights(w_hwio, width):
    """(3,3,Cin,Cout) HWIO conv weight -> (3, width*Cin, width*Cout) band matrices.

    band[dy][(x+dx-1)*Cin + ci, x*Cout + co] = w[dy, dx, ci, co]; out-of-range
    x+dx-1 taps are simply absent, which implements the zero padding along W.
    """
    C = w_hwio.shape[2]
    bands = []
    for dy in range(3):
        b = jnp.zeros((width * C, width * C), jnp.float32)
        for dx in range(3):
            b = b + jnp.kron(jnp.eye(width, k=1 - dx, dtype=jnp.float32),
                             w_hwio[dy, dx].astype(jnp.float32))
        bands.append(b)
    return jnp.stack(bands)


def _lane_broadcast(v, width):
    """Per-channel (C,) vector -> per-lane (1, width*C) row in x*C + c layout."""
    return jnp.tile(jnp.reshape(v.astype(jnp.float32), (1, -1)), (1, width))


def resnet_block(x_nchw, w1, g1, b1, w2, g2, b2):
    """ResNetBlock forward.  x: NCHW; conv weights: HWIO (3,3,C,C); gamma/beta: (C,)."""
    N, C, H, W = x_nchw.shape
    R, WC = N * H, W * C

    # NCHW -> lane-dense (N*H, W*C), channels fastest on the lane axis.
    x2 = jnp.transpose(x_nchw, (0, 2, 3, 1)).astype(jnp.float32).reshape(R, WC)

    # Vertically stacked bf16 band matrices: rows [dy=0; dy=1; dy=2] match the
    # in-kernel [up; center; down] lane concatenation -> one fused matmul/conv.
    wb1 = _band_weights(w1, W).reshape(3 * WC, WC).astype(jnp.bfloat16)
    wb2 = _band_weights(w2, W).reshape(3 * WC, WC).astype(jnp.bfloat16)

    g1l, b1l = _lane_broadcast(g1, W), _lane_broadcast(b1, W)
    g2l, b2l = _lane_broadcast(g2, W), _lane_broadcast(b2, W)

    out2 = pl.pallas_call(
        make_resnet_block_kernel(N, H, W, C),
        out_shape=jax.ShapeDtypeStruct((R, WC), jnp.float32),
        grid=(1,),
        in_specs=[
            pl.BlockSpec((R, WC), lambda i: (0, 0)),
            pl.BlockSpec((3 * WC, WC), lambda i: (0, 0)),
            pl.BlockSpec((3 * WC, WC), lambda i: (0, 0)),
            pl.BlockSpec((1, WC), lambda i: (0, 0)),
            pl.BlockSpec((1, WC), lambda i: (0, 0)),
            pl.BlockSpec((1, WC), lambda i: (0, 0)),
            pl.BlockSpec((1, WC), lambda i: (0, 0)),
        ],
        out_specs=pl.BlockSpec((R, WC), lambda i: (0, 0)),
        compiler_params=pltpu.CompilerParams(
            dimension_semantics=("arbitrary",)),
    )(x2, wb1, wb2, g1l, b1l, g2l, b2l)

    out = out2.reshape(N, H, W, C)
    return jnp.transpose(out, (0, 3, 1, 2))                        # NHWC -> NCHW


def reference_block(x_nchw, w1, g1, b1, w2, g2, b2):
    """Pure-JAX f32 reference (same NHWC/HWIO convention) for the correctness check."""
    x = jnp.transpose(x_nchw, (0, 2, 3, 1)).astype(jnp.float32)

    def conv(inp, w):
        return lax.conv_general_dilated(
            inp, w, window_strides=(1, 1), padding=((1, 1), (1, 1)),
            dimension_numbers=('NHWC', 'HWIO', 'NHWC'), precision=_HIGHEST)

    def bn(y, gamma, beta):
        mean = jnp.mean(y, axis=(0, 1, 2), keepdims=True)
        var = jnp.mean((y - mean) ** 2, axis=(0, 1, 2), keepdims=True)
        return (y - mean) * lax.rsqrt(var + EPS) * gamma.reshape(1, 1, 1, -1) \
            + beta.reshape(1, 1, 1, -1)

    h = jnp.maximum(bn(conv(x, w1), g1, b1), 0.0)
    h = bn(conv(h, w2), g2, b2)
    return jnp.transpose(jnp.maximum(h + x, 0.0), (0, 3, 1, 2))


if __name__ == "__main__":
    N, C, H, W = 2, 8, 16, 16   # inplanes = planes = 8, stride = 1  ->  W*C = 128 lanes
    key = jax.random.PRNGKey(0)
    k1, k2, kx, kg1, kb1, kg2, kb2 = jax.random.split(key, 7)

    # kaiming_normal_(mode='fan_out', nonlinearity='relu'): std = sqrt(2 / (Cout*3*3))
    fan_out = C * 3 * 3
    std = (2.0 / fan_out) ** 0.5
    w1 = jax.random.normal(k1, (3, 3, C, C), jnp.float32) * std    # HWIO
    w2 = jax.random.normal(k2, (3, 3, C, C), jnp.float32) * std    # HWIO
    x = jax.random.normal(kx, (N, C, H, W), jnp.float32)

    # Module-init parameters: norm1 = (1, 0); norm2 gamma = 0 (zero_residuals=True).
    g1 = jnp.ones((C,), jnp.float32)
    b1 = jnp.zeros((C,), jnp.float32)
    g2 = jnp.zeros((C,), jnp.float32)
    b2 = jnp.zeros((C,), jnp.float32)

    out = jax.block_until_ready(resnet_block(x, w1, g1, b1, w2, g2, b2))
    ref = jax.block_until_ready(reference_block(x, w1, g1, b1, w2, g2, b2))
    assert out.shape == (N, C, H, W)
    # With gamma2 = 0 the residual branch is exactly zero, so this path is exact.
    assert jnp.allclose(out, ref, rtol=1e-4, atol=1e-4), "mismatch vs reference (init params)"

    # Randomized affine params exercise the full conv2 / norm2 path.  The conv
    # matmuls are single-pass bf16 on the MXU (per perf review), so compare at
    # bf16-level tolerance; BN statistics themselves are exact f32.
    g1r = jax.random.normal(kg1, (C,), jnp.float32)
    b1r = jax.random.normal(kb1, (C,), jnp.float32)
    g2r = jax.random.normal(kg2, (C,), jnp.float32)
    b2r = jax.random.normal(kb2, (C,), jnp.float32)
    out_r = jax.block_until_ready(resnet_block(x, w1, g1r, b1r, w2, g2r, b2r))
    ref_r = jax.block_until_ready(reference_block(x, w1, g1r, b1r, w2, g2r, b2r))
    assert jnp.allclose(out_r, ref_r, rtol=2e-2, atol=5e-2), \
        "mismatch vs reference (random params, bf16 tolerance)"

    print("KERNEL_OK")
</pallas_src>

<mosaic_0001>
module attributes {stable_mosaic.version = 11 : i64} {
  func.func @kernel(%arg0: i32, %arg1: memref<32x128xf32, #tpu.memory_space<vmem>>, %arg2: memref<384x128xbf16, #tpu.memory_space<vmem>>, %arg3: memref<384x128xbf16, #tpu.memory_space<vmem>>, %arg4: memref<1x128xf32, #tpu.memory_space<vmem>>, %arg5: memref<1x128xf32, #tpu.memory_space<vmem>>, %arg6: memref<1x128xf32, #tpu.memory_space<vmem>>, %arg7: memref<1x128xf32, #tpu.memory_space<vmem>>, %arg8: memref<32x128xf32, #tpu.memory_space<vmem>>) attributes {dimension_semantics = [#tpu.dimension_semantics<arbitrary>], iteration_bounds = array<i64: 1>, scalar_prefetch = 0 : i64, scratch_operands = 0 : i64, tpu.core_type = #tpu.core_type<tc>, window_params = [{pipeline_mode = #tpu.pipeline_mode<synchronous>, transform_indices = @transform_0, window_bounds = array<i64: 32, 128>}, {pipeline_mode = #tpu.pipeline_mode<synchronous>, transform_indices = @transform_1, window_bounds = array<i64: 384, 128>}, {pipeline_mode = #tpu.pipeline_mode<synchronous>, transform_indices = @transform_2, window_bounds = array<i64: 384, 128>}, {pipeline_mode = #tpu.pipeline_mode<synchronous>, transform_indices = @transform_3, window_bounds = array<i64: 1, 128>}, {pipeline_mode = #tpu.pipeline_mode<synchronous>, transform_indices = @transform_4, window_bounds = array<i64: 1, 128>}, {pipeline_mode = #tpu.pipeline_mode<synchronous>, transform_indices = @transform_5, window_bounds = array<i64: 1, 128>}, {pipeline_mode = #tpu.pipeline_mode<synchronous>, transform_indices = @transform_6, window_bounds = array<i64: 1, 128>}, {pipeline_mode = #tpu.pipeline_mode<synchronous>, transform_indices = @transform_7, window_bounds = array<i64: 32, 128>}]} {
    %c0 = arith.constant 0 : index
    %c0_0 = arith.constant 0 : index
    %0 = vector.load %arg1[%c0, %c0_0] : memref<32x128xf32, #tpu.memory_space<vmem>>, vector<32x128xf32>
    %1 = tpu.iota {dimensions = array<i32: 0>} : vector<32x1xi32>
    %c16_i32 = arith.constant 16 : i32
    %c0_i32 = arith.constant 0 : i32
    %2 = arith.cmpi eq, %c16_i32, %c0_i32 : i32
    %c1_i32 = arith.constant 1 : i32
    %3 = arith.select %2, %c1_i32, %c16_i32 : i32
    %4 = vector.broadcast %3 : i32 to vector<32x1xi32>
    %5 = arith.remsi %1, %4 : vector<32x1xi32>
    %c0_i32_1 = arith.constant 0 : i32
    %6 = vector.broadcast %c0_i32_1 : i32 to vector<32x1xi32>
    %7 = arith.cmpi ne, %5, %6 : vector<32x1xi32>
    %c0_i32_2 = arith.constant 0 : i32
    %8 = vector.broadcast %c0_i32_2 : i32 to vector<32x1xi32>
    %9 = arith.cmpi slt, %5, %8 : vector<32x1xi32>
    %c0_i32_3 = arith.constant 0 : i32
    %10 = arith.cmpi slt, %3, %c0_i32_3 : i32
    %11 = vector.broadcast %10 : i1 to vector<32x1xi1>
    %12 = vector.broadcast %11 : vector<32x1xi1> to vector<32x1xi1>
    %13 = arith.xori %9, %12 : vector<32x1xi1>
    %14 = arith.andi %13, %7 : vector<32x1xi1>
    %15 = vector.broadcast %3 : i32 to vector<32x1xi32>
    %16 = arith.addi %5, %15 : vector<32x1xi32>
    %17 = arith.select %14, %16, %5 : vector<32x1xi1>, vector<32x1xi32>
    %c0_i32_4 = arith.constant 0 : i32
    %18 = vector.broadcast %c0_i32_4 : i32 to vector<32x1xi32>
    %19 = arith.cmpi ne, %17, %18 : vector<32x1xi32>
    %c16_i32_5 = arith.constant 16 : i32
    %c0_i32_6 = arith.constant 0 : i32
    %20 = arith.cmpi eq, %c16_i32_5, %c0_i32_6 : i32
    %c1_i32_7 = arith.constant 1 : i32
    %21 = arith.select %20, %c1_i32_7, %c16_i32_5 : i32
    %22 = vector.broadcast %21 : i32 to vector<32x1xi32>
    %23 = arith.remsi %1, %22 : vector<32x1xi32>
    %c0_i32_8 = arith.constant 0 : i32
    %24 = vector.broadcast %c0_i32_8 : i32 to vector<32x1xi32>
    %25 = arith.cmpi ne, %23, %24 : vector<32x1xi32>
    %c0_i32_9 = arith.constant 0 : i32
    %26 = vector.broadcast %c0_i32_9 : i32 to vector<32x1xi32>
    %27 = arith.cmpi slt, %23, %26 : vector<32x1xi32>
    %c0_i32_10 = arith.constant 0 : i32
    %28 = arith.cmpi slt, %21, %c0_i32_10 : i32
    %29 = vector.broadcast %28 : i1 to vector<32x1xi1>
    %30 = vector.broadcast %29 : vector<32x1xi1> to vector<32x1xi1>
    %31 = arith.xori %27, %30 : vector<32x1xi1>
    %32 = arith.andi %31, %25 : vector<32x1xi1>
    %33 = vector.broadcast %21 : i32 to vector<32x1xi32>
    %34 = arith.addi %23, %33 : vector<32x1xi32>
    %35 = arith.select %32, %34, %23 : vector<32x1xi1>, vector<32x1xi32>
    %c15_i32 = arith.constant 15 : i32
    %36 = vector.broadcast %c15_i32 : i32 to vector<32x1xi32>
    %37 = arith.cmpi ne, %35, %36 : vector<32x1xi32>
    %c1_i32_11 = arith.constant 1 : i32
    %38 = tpu.dynamic_rotate %0 by %c1_i32_11 dim 0 : vector<32x128xf32>, i32 -> vector<32x128xf32>
    %cst = arith.constant 0.000000e+00 : f32
    %39 = vector.shape_cast %19 : vector<32x1xi1> to vector<32x1xi1>
    %40 = vector.broadcast %39 : vector<32x1xi1> to vector<32x128xi1>
    %41 = vector.broadcast %cst : f32 to vector<32x128xf32>
    %42 = arith.select %40, %38, %41 : vector<32x128xi1>, vector<32x128xf32>
    %c31_i32 = arith.constant 31 : i32
    %43 = tpu.dynamic_rotate %0 by %c31_i32 dim 0 : vector<32x128xf32>, i32 -> vector<32x128xf32>
    %cst_12 = arith.constant 0.000000e+00 : f32
    %44 = vector.shape_cast %37 : vector<32x1xi1> to vector<32x1xi1>
    %45 = vector.broadcast %44 : vector<32x1xi1> to vector<32x128xi1>
    %46 = vector.broadcast %cst_12 : f32 to vector<32x128xf32>
    %47 = arith.select %45, %43, %46 : vector<32x128xi1>, vector<32x128xf32>
    %48 = tpu.concatenate %42, %0, %47 in 1 : vector<32x128xf32>, vector<32x128xf32>, vector<32x128xf32> -> vector<32x384xf32>
    %49 = arith.truncf %48 : vector<32x384xf32> to vector<32x384xbf16>
    %c0_13 = arith.constant 0 : index
    %c0_14 = arith.constant 0 : index
    %50 = vector.load %arg2[%c0_13, %c0_14] : memref<384x128xbf16, #tpu.memory_space<vmem>>, vector<384x128xbf16>
    %cst_15 = arith.constant dense<0.000000e+00> : vector<32x128xf32>
    %51 = tpu.matmul %49, %50, %cst_15 {dimension_numbers = #tpu.dot_dimension_numbers<[1], [0], [0], [1], [0, 0, 1, 1], [], []>} : vector<32x384xbf16>, vector<384x128xbf16>, vector<32x128xf32> -> vector<32x128xf32>
    %c0_16 = arith.constant 0 : index
    %c0_17 = arith.constant 0 : index
    %52 = vector.load %arg4[%c0_16, %c0_17] : memref<1x128xf32, #tpu.memory_space<vmem>>, vector<1x128xf32>
    %c0_18 = arith.constant 0 : index
    %c0_19 = arith.constant 0 : index
    %53 = vector.load %arg5[%c0_18, %c0_19] : memref<1x128xf32, #tpu.memory_space<vmem>>, vector<1x128xf32>
    %cst_20 = arith.constant dense<0.000000e+00> : vector<128xf32>
    %54 = vector.multi_reduction <add>, %51, %cst_20 [0] : vector<32x128xf32> to vector<128xf32>
    %55 = vector.shape_cast %54 : vector<128xf32> to vector<1x128xf32>
    %56 = arith.mulf %51, %51 : vector<32x128xf32>
    %cst_21 = arith.constant dense<0.000000e+00> : vector<128xf32>
    %57 = vector.multi_reduction <add>, %56, %cst_21 [0] : vector<32x128xf32> to vector<128xf32>
    %58 = vector.shape_cast %57 : vector<128xf32> to vector<1x128xf32>
    %c8_i32 = arith.constant 8 : i32
    %59 = tpu.dynamic_rotate %55 by %c8_i32 dim 1 : vector<1x128xf32>, i32 -> vector<1x128xf32>
    %60 = arith.addf %55, %59 : vector<1x128xf32>
    %c16_i32_22 = arith.constant 16 : i32
    %61 = tpu.dynamic_rotate %60 by %c16_i32_22 dim 1 : vector<1x128xf32>, i32 -> vector<1x128xf32>
    %62 = arith.addf %60, %61 : vector<1x128xf32>
    %c32_i32 = arith.constant 32 : i32
    %63 = tpu.dynamic_rotate %62 by %c32_i32 dim 1 : vector<1x128xf32>, i32 -> vector<1x128xf32>
    %64 = arith.addf %62, %63 : vector<1x128xf32>
    %c64_i32 = arith.constant 64 : i32
    %65 = tpu.dynamic_rotate %64 by %c64_i32 dim 1 : vector<1x128xf32>, i32 -> vector<1x128xf32>
    %66 = arith.addf %64, %65 : vector<1x128xf32>
    %cst_23 = arith.constant 0.001953125 : f32
    %67 = vector.broadcast %cst_23 : f32 to vector<1x128xf32>
    %68 = arith.mulf %66, %67 : vector<1x128xf32>
    %c8_i32_24 = arith.constant 8 : i32
    %69 = tpu.dynamic_rotate %58 by %c8_i32_24 dim 1 : vector<1x128xf32>, i32 -> vector<1x128xf32>
    %70 = arith.addf %58, %69 : vector<1x128xf32>
    %c16_i32_25 = arith.constant 16 : i32
    %71 = tpu.dynamic_rotate %70 by %c16_i32_25 dim 1 : vector<1x128xf32>, i32 -> vector<1x128xf32>
    %72 = arith.addf %70, %71 : vector<1x128xf32>
    %c32_i32_26 = arith.constant 32 : i32
    %73 = tpu.dynamic_rotate %72 by %c32_i32_26 dim 1 : vector<1x128xf32>, i32 -> vector<1x128xf32>
    %74 = arith.addf %72, %73 : vector<1x128xf32>
    %c64_i32_27 = arith.constant 64 : i32
    %75 = tpu.dynamic_rotate %74 by %c64_i32_27 dim 1 : vector<1x128xf32>, i32 -> vector<1x128xf32>
    %76 = arith.addf %74, %75 : vector<1x128xf32>
    %cst_28 = arith.constant 0.001953125 : f32
    %77 = vector.broadcast %cst_28 : f32 to vector<1x128xf32>
    %78 = arith.mulf %76, %77 : vector<1x128xf32>
    %79 = arith.mulf %68, %68 : vector<1x128xf32>
    %80 = arith.subf %78, %79 : vector<1x128xf32>
    %cst_29 = arith.constant 9.99999974E-6 : f32
    %81 = vector.broadcast %cst_29 : f32 to vector<1x128xf32>
    %82 = arith.addf %80, %81 : vector<1x128xf32>
    %83 = math.rsqrt %82 : vector<1x128xf32>
    %84 = arith.mulf %52, %83 : vector<1x128xf32>
    %85 = arith.mulf %68, %84 : vector<1x128xf32>
    %86 = arith.subf %53, %85 : vector<1x128xf32>
    %87 = vector.broadcast %84 : vector<1x128xf32> to vector<32x128xf32>
    %88 = arith.mulf %51, %87 : vector<32x128xf32>
    %89 = vector.broadcast %86 : vector<1x128xf32> to vector<32x128xf32>
    %90 = arith.addf %88, %89 : vector<32x128xf32>
    %cst_30 = arith.constant 0.000000e+00 : f32
    %91 = vector.broadcast %cst_30 : f32 to vector<32x128xf32>
    %92 = arith.maximumf %90, %91 : vector<32x128xf32>
    %c1_i32_31 = arith.constant 1 : i32
    %93 = tpu.dynamic_rotate %92 by %c1_i32_31 dim 0 : vector<32x128xf32>, i32 -> vector<32x128xf32>
    %cst_32 = arith.constant 0.000000e+00 : f32
    %94 = vector.shape_cast %19 : vector<32x1xi1> to vector<32x1xi1>
    %95 = vector.broadcast %94 : vector<32x1xi1> to vector<32x128xi1>
    %96 = vector.broadcast %cst_32 : f32 to vector<32x128xf32>
    %97 = arith.select %95, %93, %96 : vector<32x128xi1>, vector<32x128xf32>
    %c31_i32_33 = arith.constant 31 : i32
    %98 = tpu.dynamic_rotate %92 by %c31_i32_33 dim 0 : vector<32x128xf32>, i32 -> vector<32x128xf32>
    %cst_34 = arith.constant 0.000000e+00 : f32
    %99 = vector.shape_cast %37 : vector<32x1xi1> to vector<32x1xi1>
    %100 = vector.broadcast %99 : vector<32x1xi1> to vector<32x128xi1>
    %101 = vector.broadcast %cst_34 : f32 to vector<32x128xf32>
    %102 = arith.select %100, %98, %101 : vector<32x128xi1>, vector<32x128xf32>
    %103 = tpu.concatenate %97, %92, %102 in 1 : vector<32x128xf32>, vector<32x128xf32>, vector<32x128xf32> -> vector<32x384xf32>
    %104 = arith.truncf %103 : vector<32x384xf32> to vector<32x384xbf16>
    %c0_35 = arith.constant 0 : index
    %c0_36 = arith.constant 0 : index
    %105 = vector.load %arg3[%c0_35, %c0_36] : memref<384x128xbf16, #tpu.memory_space<vmem>>, vector<384x128xbf16>
    %cst_37 = arith.constant dense<0.000000e+00> : vector<32x128xf32>
    %106 = tpu.matmul %104, %105, %cst_37 {dimension_numbers = #tpu.dot_dimension_numbers<[1], [0], [0], [1], [0, 0, 1, 1], [], []>} : vector<32x384xbf16>, vector<384x128xbf16>, vector<32x128xf32> -> vector<32x128xf32>
    %c0_38 = arith.constant 0 : index
    %c0_39 = arith.constant 0 : index
    %107 = vector.load %arg6[%c0_38, %c0_39] : memref<1x128xf32, #tpu.memory_space<vmem>>, vector<1x128xf32>
    %c0_40 = arith.constant 0 : index
    %c0_41 = arith.constant 0 : index
    %108 = vector.load %arg7[%c0_40, %c0_41] : memref<1x128xf32, #tpu.memory_space<vmem>>, vector<1x128xf32>
    %cst_42 = arith.constant dense<0.000000e+00> : vector<128xf32>
    %109 = vector.multi_reduction <add>, %106, %cst_42 [0] : vector<32x128xf32> to vector<128xf32>
    %110 = vector.shape_cast %109 : vector<128xf32> to vector<1x128xf32>
    %111 = arith.mulf %106, %106 : vector<32x128xf32>
    %cst_43 = arith.constant dense<0.000000e+00> : vector<128xf32>
    %112 = vector.multi_reduction <add>, %111, %cst_43 [0] : vector<32x128xf32> to vector<128xf32>
    %113 = vector.shape_cast %112 : vector<128xf32> to vector<1x128xf32>
    %c8_i32_44 = arith.constant 8 : i32
    %114 = tpu.dynamic_rotate %110 by %c8_i32_44 dim 1 : vector<1x128xf32>, i32 -> vector<1x128xf32>
    %115 = arith.addf %110, %114 : vector<1x128xf32>
    %c16_i32_45 = arith.constant 16 : i32
    %116 = tpu.dynamic_rotate %115 by %c16_i32_45 dim 1 : vector<1x128xf32>, i32 -> vector<1x128xf32>
    %117 = arith.addf %115, %116 : vector<1x128xf32>
    %c32_i32_46 = arith.constant 32 : i32
    %118 = tpu.dynamic_rotate %117 by %c32_i32_46 dim 1 : vector<1x128xf32>, i32 -> vector<1x128xf32>
    %119 = arith.addf %117, %118 : vector<1x128xf32>
    %c64_i32_47 = arith.constant 64 : i32
    %120 = tpu.dynamic_rotate %119 by %c64_i32_47 dim 1 : vector<1x128xf32>, i32 -> vector<1x128xf32>
    %121 = arith.addf %119, %120 : vector<1x128xf32>
    %cst_48 = arith.constant 0.001953125 : f32
    %122 = vector.broadcast %cst_48 : f32 to vector<1x128xf32>
    %123 = arith.mulf %121, %122 : vector<1x128xf32>
    %c8_i32_49 = arith.constant 8 : i32
    %124 = tpu.dynamic_rotate %113 by %c8_i32_49 dim 1 : vector<1x128xf32>, i32 -> vector<1x128xf32>
    %125 = arith.addf %113, %124 : vector<1x128xf32>
    %c16_i32_50 = arith.constant 16 : i32
    %126 = tpu.dynamic_rotate %125 by %c16_i32_50 dim 1 : vector<1x128xf32>, i32 -> vector<1x128xf32>
    %127 = arith.addf %125, %126 : vector<1x128xf32>
    %c32_i32_51 = arith.constant 32 : i32
    %128 = tpu.dynamic_rotate %127 by %c32_i32_51 dim 1 : vector<1x128xf32>, i32 -> vector<1x128xf32>
    %129 = arith.addf %127, %128 : vector<1x128xf32>
    %c64_i32_52 = arith.constant 64 : i32
    %130 = tpu.dynamic_rotate %129 by %c64_i32_52 dim 1 : vector<1x128xf32>, i32 -> vector<1x128xf32>
    %131 = arith.addf %129, %130 : vector<1x128xf32>
    %cst_53 = arith.constant 0.001953125 : f32
    %132 = vector.broadcast %cst_53 : f32 to vector<1x128xf32>
    %133 = arith.mulf %131, %132 : vector<1x128xf32>
    %134 = arith.mulf %123, %123 : vector<1x128xf32>
    %135 = arith.subf %133, %134 : vector<1x128xf32>
    %cst_54 = arith.constant 9.99999974E-6 : f32
    %136 = vector.broadcast %cst_54 : f32 to vector<1x128xf32>
    %137 = arith.addf %135, %136 : vector<1x128xf32>
    %138 = math.rsqrt %137 : vector<1x128xf32>
    %139 = arith.mulf %107, %138 : vector<1x128xf32>
    %140 = arith.mulf %123, %139 : vector<1x128xf32>
    %141 = arith.subf %108, %140 : vector<1x128xf32>
    %142 = vector.broadcast %139 : vector<1x128xf32> to vector<32x128xf32>
    %143 = arith.mulf %106, %142 : vector<32x128xf32>
    %144 = vector.broadcast %141 : vector<1x128xf32> to vector<32x128xf32>
    %145 = arith.addf %143, %144 : vector<32x128xf32>
    %146 = arith.addf %145, %0 : vector<32x128xf32>
    %cst_55 = arith.constant 0.000000e+00 : f32
    %147 = vector.broadcast %cst_55 : f32 to vector<32x128xf32>
    %148 = arith.maximumf %146, %147 : vector<32x128xf32>
    %c0_56 = arith.constant 0 : index
    %c0_57 = arith.constant 0 : index
    %149 = vector.load %arg8[%c0_56, %c0_57] : memref<32x128xf32, #tpu.memory_space<vmem>>, vector<32x128xf32>
    tpu.vector_store %arg8[%c0_56, %c0_57], %148 {strides = array<i32>} : memref<32x128xf32, #tpu.memory_space<vmem>>, vector<32x128xf32>,
    return
  }
  func.func @transform_0(%arg0: i32) -> (i32, i32) {
    %c0_i32 = arith.constant 0 : i32
    %c0_i32_0 = arith.constant 0 : i32
    %c0_i32_1 = arith.constant 0 : i32
    return %c0_i32, %c0_i32_0 : i32, i32
  }
  func.func @transform_1(%arg0: i32) -> (i32, i32) {
    %c0_i32 = arith.constant 0 : i32
    %c0_i32_0 = arith.constant 0 : i32
    %c0_i32_1 = arith.constant 0 : i32
    return %c0_i32, %c0_i32_0 : i32, i32
  }
  func.func @transform_2(%arg0: i32) -> (i32, i32) {
    %c0_i32 = arith.constant 0 : i32
    %c0_i32_0 = arith.constant 0 : i32
    %c0_i32_1 = arith.constant 0 : i32
    return %c0_i32, %c0_i32_0 : i32, i32
  }
  func.func @transform_3(%arg0: i32) -> (i32, i32) {
    %c0_i32 = arith.constant 0 : i32
    %c0_i32_0 = arith.constant 0 : i32
    %c0_i32_1 = arith.constant 0 : i32
    return %c0_i32, %c0_i32_0 : i32, i32
  }
  func.func @transform_4(%arg0: i32) -> (i32, i32) {
    %c0_i32 = arith.constant 0 : i32
    %c0_i32_0 = arith.constant 0 : i32
    %c0_i32_1 = arith.constant 0 : i32
    return %c0_i32, %c0_i32_0 : i32, i32
  }
  func.func @transform_5(%arg0: i32) -> (i32, i32) {
    %c0_i32 = arith.constant 0 : i32
    %c0_i32_0 = arith.constant 0 : i32
    %c0_i32_1 = arith.constant 0 : i32
    return %c0_i32, %c0_i32_0 : i32, i32
  }
  func.func @transform_6(%arg0: i32) -> (i32, i32) {
    %c0_i32 = arith.constant 0 : i32
    %c0_i32_0 = arith.constant 0 : i32
    %c0_i32_1 = arith.constant 0 : i32
    return %c0_i32, %c0_i32_0 : i32, i32
  }
  func.func @transform_7(%arg0: i32) -> (i32, i32) {
    %c0_i32 = arith.constant 0 : i32
    %c0_i32_0 = arith.constant 0 : i32
    %c0_i32_1 = arith.constant 0 : i32
    return %c0_i32, %c0_i32_0 : i32, i32
  }
}

</mosaic_0001>

<llo_original>
// kernel: tpu_custom_call.1
$region0: #{tpu_custom_call.1}
  #allocation0 [shape = 'u32[]', space=smem, size = 0x4, offset = 0x4, fixed_abs, tag = 'smem constant byte address 0x4 - core index']
  #allocation1 [shape = 'u32[72,128]{1,0:T(1,128)}', space=vmem, size = 0x9000, scoped, tag = 'internal scratch']
  %s0 = inlined_call_operand.hbm [shape: f32[32,128], index: 0, kind: input, shape index: {}]
  %s1 = inlined_call_operand.hbm [shape: bf16[384,128], index: 1, kind: input, shape index: {}]
  %s2 = inlined_call_operand.hbm [shape: bf16[384,128], index: 2, kind: input, shape index: {}]
  %s3 = inlined_call_operand.vmem [shape: f32[1,128], index: 3, kind: input, shape index: {}]
  %s4 = inlined_call_operand.vmem [shape: f32[1,128], index: 4, kind: input, shape index: {}]
  %s5 = inlined_call_operand.vmem [shape: f32[1,128], index: 5, kind: input, shape index: {}]
  %s6 = inlined_call_operand.vmem [shape: f32[1,128], index: 6, kind: input, shape index: {}]
  %s7 = inlined_call_operand.hbm [shape: f32[32,128], index: 7, kind: output, shape index: {}]
  %s8 = sld [smem:[#allocation0]]
  $region50: #{tpu_custom_call.1} parent=0
    _
  %s10 = ssub.s32 1, %s8
  %s11 = scalar_select 0, %s10, %s8
  $region1: #{tpu_custom_call.1} parent=0
    #allocation2 [shape = 'u8[16384]{0}', space=vmem, size = 0x4000, scoped, tag = 'input window, operand 0, single buffered']
    #allocation3 [shape = 's32[1]{0}', space=sflag, size = 0x4, scoped, tag = 'scoped memory for tpu_custom_call.1']
    #allocation4 [shape = 's32[1]{0}', space=sflag, size = 0x4, scoped, tag = 'scoped memory for tpu_custom_call.1']
    #allocation5 [shape = 'u8[98304]{0}', space=vmem, size = 0x18000, scoped, tag = 'input window, operand 1, single buffered']
    #allocation6 [shape = 's32[1]{0}', space=sflag, size = 0x4, scoped, tag = 'scoped memory for tpu_custom_call.1']
    #allocation7 [shape = 'u8[98304]{0}', space=vmem, size = 0x18000, scoped, tag = 'input window, operand 2, single buffered']
    #allocation8 [shape = 'u8[16384]{0}', space=vmem, size = 0x4000, scoped, tag = 'output window, operand 0, single buffered']
    %12 = vsyncpa [#allocation3], 0
    %13 = vsyncpa [#allocation6], 0
    %14 = vsyncpa [#allocation4], 0
    // Predicated region
    $region2: #{tpu_custom_call.1} parent=1 // pred_check
      _
    $region3: #{tpu_custom_call.1} parent=1 // pred_check_branch
      %16 = sbr.rel (0) target = $region5
    $region4: #{tpu_custom_call.1} parent=1 // pred_region
      %18 = vsyncadd [#allocation3], 0
      %s19 = sshll.u32 %s0, 4
      %s20 = int_to_ptr.hbm [resolvable:$true] %s19
      %s21 = sshll.u32 [#allocation2], 4
      %s22 = int_to_ptr.vmem [resolvable:$true] %s21
      %27 = dma.hbm_to_vmem [thread:$0]  %s20, 512, %s22, [#allocation3], 128, 128, 8
    $region5: #{tpu_custom_call.1} parent=1 // pred_fallthru
      _
    // Predicated region
    $region6: #{tpu_custom_call.1} parent=1 // pred_check
      _
    $region7: #{tpu_custom_call.1} parent=1 // pred_check_branch
      %29 = sbr.rel (0) target = $region9
    $region8: #{tpu_custom_call.1} parent=1 // pred_region
      %31 = vsyncadd [#allocation6], 0
      %s32 = sshll.u32 %s1, 4
      %s33 = int_to_ptr.hbm [resolvable:$true] %s32
      %s34 = sshll.u32 [#allocation5], 4
      %s35 = int_to_ptr.vmem [resolvable:$true] %s34
      %40 = dma.hbm_to_vmem [thread:$0]  %s33, 3072, %s35, [#allocation6], 64, 64, 4
    $region9: #{tpu_custom_call.1} parent=1 // pred_fallthru
      _
    // Predicated region
    $region10: #{tpu_custom_call.1} parent=1 // pred_check
      _
    $region11: #{tpu_custom_call.1} parent=1 // pred_check_branch
      %42 = sbr.rel (0) target = $region13
    $region12: #{tpu_custom_call.1} parent=1 // pred_region
      %44 = vsyncadd [#allocation6], 0
      %s45 = sshll.u32 %s2, 4
      %s46 = int_to_ptr.hbm [resolvable:$true] %s45
      %s47 = sshll.u32 [#allocation7], 4
      %s48 = int_to_ptr.vmem [resolvable:$true] %s47
      %53 = dma.hbm_to_vmem [thread:$0]  %s46, 3072, %s48, [#allocation6], 64, 64, 4
    $region13: #{tpu_custom_call.1} parent=1 // pred_fallthru
      _
    // Predicated region
    $region14: #{tpu_custom_call.1} parent=1 // pred_check
      _
    $region15: #{tpu_custom_call.1} parent=1 // pred_check_branch
      %55 = sbr.rel (0) target = $region17
    $region16: #{tpu_custom_call.1} parent=1 // pred_region
      _
    $region17: #{tpu_custom_call.1} parent=1 // pred_fallthru
      _
    // Predicated region
    $region18: #{tpu_custom_call.1} parent=1 // pred_check
      _
    $region19: #{tpu_custom_call.1} parent=1 // pred_check_branch
      %57 = sbr.rel (0) target = $region21
    $region20: #{tpu_custom_call.1} parent=1 // pred_region
      _
    $region21: #{tpu_custom_call.1} parent=1 // pred_fallthru
      _
    // Predicated region
    $region22: #{tpu_custom_call.1} parent=1 // pred_check
      _
    $region23: #{tpu_custom_call.1} parent=1 // pred_check_branch
      %59 = sbr.rel (0) target = $region25
    $region24: #{tpu_custom_call.1} parent=1 // pred_region
      _
    $region25: #{tpu_custom_call.1} parent=1 // pred_fallthru
      _
    // Predicated region
    $region26: #{tpu_custom_call.1} parent=1 // pred_check
      _
    $region27: #{tpu_custom_call.1} parent=1 // pred_check_branch
      %61 = sbr.rel (0) target = $region29
    $region28: #{tpu_custom_call.1} parent=1 // pred_region
      _
    $region29: #{tpu_custom_call.1} parent=1 // pred_fallthru
      _
    // Predicated region
    $region30: #{tpu_custom_call.1} parent=1 // pred_check
      _
    $region31: #{tpu_custom_call.1} parent=1 // pred_check_branch
      %63 = sbr.rel (0) target = $region33
    $region32: #{tpu_custom_call.1} parent=1 // pred_region
      %65 = dma.done [#allocation3], 512
    $region33: #{tpu_custom_call.1} parent=1 // pred_fallthru
      _
    // Predicated region
    $region34: #{tpu_custom_call.1} parent=1 // pred_check
      _
    $region35: #{tpu_custom_call.1} parent=1 // pred_check_branch
      %67 = sbr.rel (0) target = $region37
    $region36: #{tpu_custom_call.1} parent=1 // pred_region
      %69 = dma.done [#allocation6], 3072
    $region37: #{tpu_custom_call.1} parent=1 // pred_fallthru
      _
    // Predicated region
    $region38: #{tpu_custom_call.1} parent=1 // pred_check
      _
    $region39: #{tpu_custom_call.1} parent=1 // pred_check_branch
      %71 = sbr.rel (0) target = $region41
    $region40: #{tpu_custom_call.1} parent=1 // pred_region
      %73 = dma.done [#allocation6], 3072
    $region41: #{tpu_custom_call.1} parent=1 // pred_fallthru
      _
    %v74 = vld [vmem:[#allocation2] sm:$0xff]
    %v75 = vld [vmem:[#allocation2 + $0x8] sm:$0xff]
    %v76 = vld [vmem:[#allocation2 + $0x10] sm:$0xff]
    %v77 = vld [vmem:[#allocation2 + $0x18] sm:$0xff]
    %v78 = vlaneseq
    %v79 = vshrl.u32 %v78, 7
    %v80 = vadd.s32 %v79, 8
    %v81 = vadd.s32 %v79, 16
    %v82 = vadd.s32 %v79, 24
    %vm83 = vcmp.lt.s32.totalorder %v79, 0
    %v84 = vsub.s32 0, %v79
    %v85 = vsel %vm83, %v84, %v79
    %v86 = vshrl.u32 %v85, 4
    %v87 = vand.u32 %v85, 15
    %v88 = vsub.s32 0, %v87
    %v89 = vsel %vm83, %v88, %v87
    %vm90 = vcmp.lt.s32.totalorder %v80, 0
    %v91 = vsub.s32 0, %v80
    %v92 = vsel %vm90, %v91, %v80
    %v93 = vshrl.u32 %v92, 4
    %v94 = vand.u32 %v92, 15
    %v95 = vsub.s32 0, %v94
    %v96 = vsel %vm90, %v95, %v94
    %vm97 = vcmp.lt.s32.totalorder %v81, 0
    %v98 = vsub.s32 0, %v81
    %v99 = vsel %vm97, %v98, %v81
    %v100 = vshrl.u32 %v99, 4
    %v101 = vand.u32 %v99, 15
    %v102 = vsub.s32 0, %v101
    %v103 = vsel %vm97, %v102, %v101
    %vm104 = vcmp.lt.s32.totalorder %v82, 0
    %v105 = vsub.s32 0, %v82
    %v106 = vsel %vm104, %v105, %v82
    %v107 = vshrl.u32 %v106, 4
    %v108 = vand.u32 %v106, 15
    %v109 = vsub.s32 0, %v108
    %v110 = vsel %vm104, %v109, %v108
    %vm111 = vcmp.ne.s32.totalorder %v89, 0
    %vm112 = vcmp.ne.s32.totalorder %v96, 0
    %vm113 = vcmp.ne.s32.totalorder %v103, 0
    %vm114 = vcmp.ne.s32.totalorder %v110, 0
    %vm115 = vcmp.lt.s32.totalorder %v89, 0
    %vm116 = vcmp.lt.s32.totalorder %v96, 0
    %vm117 = vcmp.lt.s32.totalorder %v103, 0
    %vm118 = vcmp.lt.s32.totalorder %v110, 0
    %vm119 = vmand %vm115, %vm111
    %vm120 = vmand %vm116, %vm112
    %vm121 = vmand %vm117, %vm113
    %vm122 = vmand %vm118, %vm114
    %v123 = vadd.s32 %v89, 16
    %v124 = vadd.s32 %v96, 16
    %v125 = vadd.s32 %v103, 16
    %v126 = vadd.s32 %v110, 16
    %v127 = vsel %vm119, %v123, %v89
    %v128 = vsel %vm120, %v124, %v96
    %v129 = vsel %vm121, %v125, %v103
    %v130 = vsel %vm122, %v126, %v110
    %vm131 = vcmp.ne.s32.totalorder %v127, 0
    %vm132 = vcmp.ne.s32.totalorder %v128, 0
    %vm133 = vcmp.ne.s32.totalorder %v129, 0
    %vm134 = vcmp.ne.s32.totalorder %v130, 0
    %vm135 = vcmp.ne.s32.totalorder %v127, 15
    %vm136 = vcmp.ne.s32.totalorder %v128, 15
    %vm137 = vcmp.ne.s32.totalorder %v129, 15
    %vm138 = vcmp.ne.s32.totalorder %v130, 15
    %v139 = vrot.slane %v74, 7
    %v140 = vrot.slane %v75, 7
    %v141 = vrot.slane %v76, 7
    %v142 = vrot.slane %v77, 7
    %vm143 = vcmp.lt.s32.totalorder %v79, 1
    %v144 = vsel %vm143, %v141, %v142
    %v145 = vsel %vm143, %v140, %v141
    %v146 = vsel %vm143, %v139, %v140
    %v147 = vsel %vm143, %v142, %v139
    %v148 = vsel %vm131, 1, 0
    %v149 = vsel %vm132, 1, 0
    %v150 = vsel %vm133, 1, 0
    %v151 = vsel %vm134, 1, 0
    %vm152 = vcmp.eq.s32.totalorder %v148, 1
    %vm153 = vcmp.eq.s32.totalorder %v149, 1
    %vm154 = vcmp.eq.s32.totalorder %v150, 1
    %vm155 = vcmp.eq.s32.totalorder %v151, 1
    %v156 = vsel %vm152, %v147, 0.0
    %v157 = vsel %vm153, %v146, 0.0
    %v158 = vsel %vm154, %v145, 0.0
    %v159 = vsel %vm155, %v144, 0.0
    %v160 = vrot.slane %v74, 1
    %v161 = vrot.slane %v75, 1
    %v162 = vrot.slane %v76, 1
    %v163 = vrot.slane %v77, 1
    %vm164 = vcmp.lt.s32.totalorder %v79, 7
    %v165 = vsel %vm164, %v162, %v163
    %v166 = vsel %vm164, %v161, %v162
    %v167 = vsel %vm164, %v160, %v161
    %v168 = vsel %vm164, %v163, %v160
    %v169 = vsel %vm135, 1, 0
    %v170 = vsel %vm136, 1, 0
    %v171 = vsel %vm137, 1, 0
    %v172 = vsel %vm138, 1, 0
    %vm173 = vcmp.eq.s32.totalorder %v169, 1
    %vm174 = vcmp.eq.s32.totalorder %v170, 1
    %vm175 = vcmp.eq.s32.totalorder %v171, 1
    %vm176 = vcmp.eq.s32.totalorder %v172, 1
    %v177 = vsel %vm173, %v167, 0.0
    %v178 = vsel %vm174, %v166, 0.0
    %v179 = vsel %vm175, %v165, 0.0
    %v180 = vsel %vm176, %v168, 0.0
    %v181 = vpack.c.bf16 %v157, %v156
    %v182 = vpack.c.bf16 %v75, %v74
    %v183 = vpack.c.bf16 %v178, %v177
    %v184 = vpack.c.bf16 %v159, %v158
    %v185 = vpack.c.bf16 %v77, %v76
    %v186 = vpack.c.bf16 %v180, %v179
    %v187 = vld [vmem:[#allocation5] sm:$0xf]
    %v188 = vld [vmem:[#allocation5 + $0x4] sm:$0xf]
    %v189 = vld [vmem:[#allocation5 + $0x8] sm:$0xf]
    %v190 = vld [vmem:[#allocation5 + $0xc] sm:$0xf]
    %v191 = vld [vmem:[#allocation5 + $0x10] sm:$0xf]
    %v192 = vld [vmem:[#allocation5 + $0x14] sm:$0xf]
    %v193 = vld [vmem:[#allocation5 + $0x18] sm:$0xf]
    %v194 = vld [vmem:[#allocation5 + $0x1c] sm:$0xf]
    %v195 = vld [vmem:[#allocation5 + $0x20] sm:$0xf]
    %v196 = vld [vmem:[#allocation5 + $0x24] sm:$0xf]
    %v197 = vld [vmem:[#allocation5 + $0x28] sm:$0xf]
    %v198 = vld [vmem:[#allocation5 + $0x2c] sm:$0xf]
    %v199 = vld [vmem:[#allocation5 + $0x30] sm:$0xf]
    %v200 = vld [vmem:[#allocation5 + $0x34] sm:$0xf]
    %v201 = vld [vmem:[#allocation5 + $0x38] sm:$0xf]
    %v202 = vld [vmem:[#allocation5 + $0x3c] sm:$0xf]
    %v203 = vld [vmem:[#allocation5 + $0x40] sm:$0xf]
    %v204 = vld [vmem:[#allocation5 + $0x44] sm:$0xf]
    %v205 = vld [vmem:[#allocation5 + $0x48] sm:$0xf]
    %v206 = vld [vmem:[#allocation5 + $0x4c] sm:$0xf]
    %v207 = vld [vmem:[#allocation5 + $0x50] sm:$0xf]
    %v208 = vld [vmem:[#allocation5 + $0x54] sm:$0xf]
    %v209 = vld [vmem:[#allocation5 + $0x58] sm:$0xf]
    %v210 = vld [vmem:[#allocation5 + $0x5c] sm:$0xf]
    %v211 = vld [vmem:[#allocation5 + $0x60] sm:$0xf]
    %v212 = vld [vmem:[#allocation5 + $0x64] sm:$0xf]
    %v213 = vld [vmem:[#allocation5 + $0x68] sm:$0xf]
    %v214 = vld [vmem:[#allocation5 + $0x6c] sm:$0xf]
    %v215 = vld [vmem:[#allocation5 + $0x70] sm:$0xf]
    %v216 = vld [vmem:[#allocation5 + $0x74] sm:$0xf]
    %v217 = vld [vmem:[#allocation5 + $0x78] sm:$0xf]
    %v218 = vld [vmem:[#allocation5 + $0x7c] sm:$0xf]
    %v219 = vld [vmem:[#allocation5 + $0x80] sm:$0xf]
    %v220 = vld [vmem:[#allocation5 + $0x84] sm:$0xf]
    %v221 = vld [vmem:[#allocation5 + $0x88] sm:$0xf]
    %v222 = vld [vmem:[#allocation5 + $0x8c] sm:$0xf]
    %v223 = vld [vmem:[#allocation5 + $0x90] sm:$0xf]
    %v224 = vld [vmem:[#allocation5 + $0x94] sm:$0xf]
    %v225 = vld [vmem:[#allocation5 + $0x98] sm:$0xf]
    %v226 = vld [vmem:[#allocation5 + $0x9c] sm:$0xf]
    %v227 = vld [vmem:[#allocation5 + $0xa0] sm:$0xf]
    %v228 = vld [vmem:[#allocation5 + $0xa4] sm:$0xf]
    %v229 = vld [vmem:[#allocation5 + $0xa8] sm:$0xf]
    %v230 = vld [vmem:[#allocation5 + $0xac] sm:$0xf]
    %v231 = vld [vmem:[#allocation5 + $0xb0] sm:$0xf]
    %v232 = vld [vmem:[#allocation5 + $0xb4] sm:$0xf]
    %v233 = vld [vmem:[#allocation5 + $0xb8] sm:$0xf]
    %v234 = vld [vmem:[#allocation5 + $0xbc] sm:$0xf]
    %v283 = vunpack.c.l.b16 %v187
    %v284 = vunpack.c.l.b16 %v188
    %v285 = vunpack.c.l.b16 %v189
    %v286 = vunpack.c.l.b16 %v190
    %v287 = vunpack.c.l.b16 %v191
    %v288 = vunpack.c.l.b16 %v192
    %v289 = vunpack.c.l.b16 %v193
    %v290 = vunpack.c.l.b16 %v194
    %v291 = vunpack.c.l.b16 %v195
    %v292 = vunpack.c.l.b16 %v196
    %v293 = vunpack.c.l.b16 %v197
    %v294 = vunpack.c.l.b16 %v198
    %v295 = vunpack.c.l.b16 %v199
    %v296 = vunpack.c.l.b16 %v200
    %v297 = vunpack.c.l.b16 %v201
    %v298 = vunpack.c.l.b16 %v202
    %v299 = vunpack.c.l.b16 %v203
    %v300 = vunpack.c.l.b16 %v204
    %v301 = vunpack.c.l.b16 %v205
    %v302 = vunpack.c.l.b16 %v206
    %v303 = vunpack.c.l.b16 %v207
    %v304 = vunpack.c.l.b16 %v208
    %v305 = vunpack.c.l.b16 %v209
    %v306 = vunpack.c.l.b16 %v210
    %v307 = vunpack.c.l.b16 %v211
    %v308 = vunpack.c.l.b16 %v212
    %v309 = vunpack.c.l.b16 %v213
    %v310 = vunpack.c.l.b16 %v214
    %v311 = vunpack.c.l.b16 %v215
    %v312 = vunpack.c.l.b16 %v216
    %v313 = vunpack.c.l.b16 %v217
    %v314 = vunpack.c.l.b16 %v218
    %v315 = vunpack.c.l.b16 %v219
    %v316 = vunpack.c.l.b16 %v220
    %v317 = vunpack.c.l.b16 %v221
    %v318 = vunpack.c.l.b16 %v222
    %v319 = vunpack.c.l.b16 %v223
    %v320 = vunpack.c.l.b16 %v224
    %v321 = vunpack.c.l.b16 %v225
    %v322 = vunpack.c.l.b16 %v226
    %v323 = vunpack.c.l.b16 %v227
    %v324 = vunpack.c.l.b16 %v228
    %v325 = vunpack.c.l.b16 %v229
    %v326 = vunpack.c.l.b16 %v230
    %v327 = vunpack.c.l.b16 %v231
    %v328 = vunpack.c.l.b16 %v232
    %v329 = vunpack.c.l.b16 %v233
    %v330 = vunpack.c.l.b16 %v234
    %v331 = vpack.c.b16 %v284, %v283
    %v332 = vpack.c.b16 %v286, %v285
    %v333 = vpack.c.b16 %v288, %v287
    %v334 = vpack.c.b16 %v290, %v289
    %v335 = vpack.c.b16 %v292, %v291
    %v336 = vpack.c.b16 %v294, %v293
    %v337 = vpack.c.b16 %v296, %v295
    %v338 = vpack.c.b16 %v298, %v297
    %v339 = vpack.c.b16 %v300, %v299
    %v340 = vpack.c.b16 %v302, %v301
    %v341 = vpack.c.b16 %v304, %v303
    %v342 = vpack.c.b16 %v306, %v305
    %v343 = vpack.c.b16 %v308, %v307
    %v344 = vpack.c.b16 %v310, %v309
    %v345 = vpack.c.b16 %v312, %v311
    %v346 = vpack.c.b16 %v314, %v313
    %v347 = vpack.c.b16 %v316, %v315
    %v348 = vpack.c.b16 %v318, %v317
    %v349 = vpack.c.b16 %v320, %v319
    %v350 = vpack.c.b16 %v322, %v321
    %v351 = vpack.c.b16 %v324, %v323
    %v352 = vpack.c.b16 %v326, %v325
    %v353 = vpack.c.b16 %v328, %v327
    %v354 = vpack.c.b16 %v330, %v329
    %379 = vmatpush.bf16.msra.mxu0 %v338
    %380 = vmatpush.bf16.msra.mxu0 %v337
    %381 = vmatpush.bf16.msra.mxu0 %v336
    %382 = vmatpush.bf16.msra.mxu0 %v335
    %383 = vmatpush.bf16.msra.mxu0 %v334
    %384 = vmatpush.bf16.msra.mxu0 %v333
    %385 = vmatpush.bf16.msra.mxu0 %v332
    %386 = vmatpush.bf16.msra.mxu0 %v331
    %387 = vmatmul.bf16.gmra.mxu0 %v181
    %v388 = vpop.f32.mrf.mxu0
    %v389 = vadd.f32 0.0, %v388
    %v390 = vpop.f32.mrf.mxu0
    %v391 = vadd.f32 0.0, %v390
    %392 = vmatmul.bf16.gmra.mxu0 %v184
    %v393 = vpop.f32.mrf.mxu0
    %v394 = vadd.f32 0.0, %v393
    %v395 = vpop.f32.mrf.mxu0
    %v396 = vadd.f32 0.0, %v395
    %397 = vdwg.mxu0
    %398 = vmatpush.bf16.msra.mxu0 %v346
    %399 = vmatpush.bf16.msra.mxu0 %v345
    %400 = vmatpush.bf16.msra.mxu0 %v344
    %401 = vmatpush.bf16.msra.mxu0 %v343
    %402 = vmatpush.bf16.msra.mxu0 %v342
    %403 = vmatpush.bf16.msra.mxu0 %v341
    %404 = vmatpush.bf16.msra.mxu0 %v340
    %405 = vmatpush.bf16.msra.mxu0 %v339
    %406 = vmatmul.bf16.gmra.mxu0 %v182
    %v407 = vpop.f32.mrf.mxu0
    %v408 = vadd.f32 %v389, %v407
    %v409 = vpop.f32.mrf.mxu0
    %v410 = vadd.f32 %v391, %v409
    %411 = vmatmul.bf16.gmra.mxu0 %v185
    %v412 = vpop.f32.mrf.mxu0
    %v413 = vadd.f32 %v394, %v412
    %v414 = vpop.f32.mrf.mxu0
    %v415 = vadd.f32 %v396, %v414
    %416 = vdwg.mxu0
    %417 = vmatpush.bf16.msra.mxu0 %v354
    %418 = vmatpush.bf16.msra.mxu0 %v353
    %419 = vmatpush.bf16.msra.mxu0 %v352
    %420 = vmatpush.bf16.msra.mxu0 %v351
    %421 = vmatpush.bf16.msra.mxu0 %v350
    %422 = vmatpush.bf16.msra.mxu0 %v349
    %423 = vmatpush.bf16.msra.mxu0 %v348
    %424 = vmatpush.bf16.msra.mxu0 %v347
    %425 = vmatmul.bf16.gmra.mxu0 %v183
    %v426 = vpop.f32.mrf.mxu0
    %v427 = vadd.f32 %v408, %v426
    %v428 = vpop.f32.mrf.mxu0
    %v429 = vadd.f32 %v410, %v428
    %430 = vmatmul.bf16.gmra.mxu0 %v186
    %v431 = vpop.f32.mrf.mxu0
    %v432 = vadd.f32 %v413, %v431
    %v433 = vpop.f32.mrf.mxu0
    %v434 = vadd.f32 %v415, %v433
    %435 = vdwg.mxu0
    %v436 = vld [vmem:[%s3] sm:$0x1]
    %v437 = vld [vmem:[%s4] sm:$0x1]
    %v438 = vadd.f32 %v427, %v429
    %v439 = vadd.f32 %v438, %v432
    %v440 = vadd.f32 %v439, %v434
    %v441 = vrot.slane %v440, 4
    %v442 = vadd.f32 %v440, %v441
    %v443 = vrot.slane %v442, 2
    %v444 = vadd.f32 %v442, %v443
    %v445 = vrot.slane %v444, 1
    %v446 = vadd.f32 %v444, %v445
    %v447 = vmul.f32 %v427, %v427
    %v448 = vmul.f32 %v429, %v429
    %v449 = vmul.f32 %v432, %v432
    %v450 = vmul.f32 %v434, %v434
    %v451 = vadd.f32 %v447, %v448
    %v452 = vadd.f32 %v451, %v449
    %v453 = vadd.f32 %v452, %v450
    %v454 = vrot.slane %v453, 4
    %v455 = vadd.f32 %v453, %v454
    %v456 = vrot.slane %v455, 2
    %v457 = vadd.f32 %v455, %v456
    %v458 = vrot.slane %v457, 1
    %v459 = vadd.f32 %v457, %v458
    %460 = vrot.lane.b32.xlu0 %v446, 8
    %v461 = vpop.permute.xlu0 %460
    %v462 = vadd.f32 %v446, %v461
    %463 = vrot.lane.b32.xlu0 %v462, 16
    %v464 = vpop.permute.xlu0 %463
    %v465 = vadd.f32 %v462, %v464
    %466 = vrot.lane.b32.xlu0 %v465, 32
    %v467 = vpop.permute.xlu0 %466
    %v468 = vadd.f32 %v465, %v467
    %469 = vrot.lane.b32.xlu0 %v468, 64
    %v470 = vpop.permute.xlu0 %469
    %v471 = vadd.f32 %v468, %v470
    %v472 = vmul.f32 %v471, 0.001953125
    %473 = vrot.lane.b32.xlu0 %v459, 8
    %v474 = vpop.permute.xlu0 %473
    %v475 = vadd.f32 %v459, %v474
    %476 = vrot.lane.b32.xlu0 %v475, 16
    %v477 = vpop.permute.xlu0 %476
    %v478 = vadd.f32 %v475, %v477
    %479 = vrot.lane.b32.xlu0 %v478, 32
    %v480 = vpop.permute.xlu0 %479
    %v481 = vadd.f32 %v478, %v480
    %482 = vrot.lane.b32.xlu0 %v481, 64
    %v483 = vpop.permute.xlu0 %482
    %v484 = vadd.f32 %v481, %v483
    %v485 = vmul.f32 %v484, 0.001953125
    %v486 = vmul.f32 %v472, %v472
    %v487 = vsub.f32 %v485, %v486
    %v488 = vadd.f32 %v487, 1e-05
    %v489 = vrsqrt.pop %v488
    %v490 = vmul.f32 %v489, %v488
    %v491 = vmul.f32 %v490, %v489
    %v492 = vmul.f32 0.5, %v491
    %v493 = vsub.f32 1.5, %v492
    %v494 = vmul.f32 %v489, %v493
    %vm495 = vweird.f32 %v488
    %vm496 = vweird.f32 %v489
    %vm497 = vmor %vm495, %vm496
    %v498 = vsel %vm497, %v489, %v494
    %v499 = vmul.f32 %v436, %v498
    %v500 = vmul.f32 %v472, %v499
    %v501 = vsub.f32 %v437, %v500
    %v503 = vperm.slane %v499, 0
    %v505 = vmul.f32 %v427, %v503
    %v506 = vmul.f32 %v429, %v503
    %v507 = vmul.f32 %v432, %v503
    %v508 = vmul.f32 %v434, %v503
    %v510 = vperm.slane %v501, 0
    %v512 = vadd.f32 %v505, %v510
    %v513 = vadd.f32 %v506, %v510
    %v514 = vadd.f32 %v507, %v510
    %v515 = vadd.f32 %v508, %v510
    %v516 = vmax.f32 %v512, 0.0
    %v517 = vmax.f32 %v513, 0.0
    %v518 = vmax.f32 %v514, 0.0
    %v519 = vmax.f32 %v515, 0.0
    %v520 = vrot.slane %v516, 7
    %v521 = vrot.slane %v517, 7
    %v522 = vrot.slane %v518, 7
    %v523 = vrot.slane %v519, 7
    %v524 = vsel %vm143, %v522, %v523
    %v525 = vsel %vm143, %v521, %v522
    %v526 = vsel %vm143, %v520, %v521
    %v527 = vsel %vm143, %v523, %v520
    %v528 = vsel %vm152, %v527, 0.0
    %v529 = vsel %vm153, %v526, 0.0
    %v530 = vsel %vm154, %v525, 0.0
    %v531 = vsel %vm155, %v524, 0.0
    %v532 = vrot.slane %v516, 1
    %v533 = vrot.slane %v517, 1
    %v534 = vrot.slane %v518, 1
    %v535 = vrot.slane %v519, 1
    %v536 = vsel %vm164, %v534, %v535
    %v537 = vsel %vm164, %v533, %v534
    %v538 = vsel %vm164, %v532, %v533
    %v539 = vsel %vm164, %v535, %v532
    %v540 = vsel %vm173, %v538, 0.0
    %v541 = vsel %vm174, %v537, 0.0
    %v542 = vsel %vm175, %v536, 0.0
    %v543 = vsel %vm176, %v539, 0.0
    %v544 = vpack.c.bf16 %v529, %v528
    %v545 = vpack.c.bf16 %v517, %v516
    %v546 = vpack.c.bf16 %v541, %v540
    %v547 = vpack.c.bf16 %v531, %v530
    %v548 = vpack.c.bf16 %v519, %v518
    %v549 = vpack.c.bf16 %v543, %v542
    %v550 = vld [vmem:[#allocation7] sm:$0xf]
    %v551 = vld [vmem:[#allocation7 + $0x4] sm:$0xf]
    %v552 = vld [vmem:[#allocation7 + $0x8] sm:$0xf]
    %v553 = vld [vmem:[#allocation7 + $0xc] sm:$0xf]
    %v554 = vld [vmem:[#allocation7 + $0x10] sm:$0xf]
    %v555 = vld [vmem:[#allocation7 + $0x14] sm:$0xf]
    %v556 = vld [vmem:[#allocation7 + $0x18] sm:$0xf]
    %v557 = vld [vmem:[#allocation7 + $0x1c] sm:$0xf]
    %v558 = vld [vmem:[#allocation7 + $0x20] sm:$0xf]
    %v559 = vld [vmem:[#allocation7 + $0x24] sm:$0xf]
    %v560 = vld [vmem:[#allocation7 + $0x28] sm:$0xf]
    %v561 = vld [vmem:[#allocation7 + $0x2c] sm:$0xf]
    %v562 = vld [vmem:[#allocation7 + $0x30] sm:$0xf]
    %v563 = vld [vmem:[#allocation7 + $0x34] sm:$0xf]
    %v564 = vld [vmem:[#allocation7 + $0x38] sm:$0xf]
    %v565 = vld [vmem:[#allocation7 + $0x3c] sm:$0xf]
    %v566 = vld [vmem:[#allocation7 + $0x40] sm:$0xf]
    %v567 = vld [vmem:[#allocation7 + $0x44] sm:$0xf]
    %v568 = vld [vmem:[#allocation7 + $0x48] sm:$0xf]
    %v569 = vld [vmem:[#allocation7 + $0x4c] sm:$0xf]
    %v570 = vld [vmem:[#allocation7 + $0x50] sm:$0xf]
    %v571 = vld [vmem:[#allocation7 + $0x54] sm:$0xf]
    %v572 = vld [vmem:[#allocation7 + $0x58] sm:$0xf]
    %v573 = vld [vmem:[#allocation7 + $0x5c] sm:$0xf]
    %v574 = vld [vmem:[#allocation7 + $0x60] sm:$0xf]
    %v575 = vld [vmem:[#allocation7 + $0x64] sm:$0xf]
    %v576 = vld [vmem:[#allocation7 + $0x68] sm:$0xf]
    %v577 = vld [vmem:[#allocation7 + $0x6c] sm:$0xf]
    %v578 = vld [vmem:[#allocation7 + $0x70] sm:$0xf]
    %v579 = vld [vmem:[#allocation7 + $0x74] sm:$0xf]
    %v580 = vld [vmem:[#allocation7 + $0x78] sm:$0xf]
    %v581 = vld [vmem:[#allocation7 + $0x7c] sm:$0xf]
    %v582 = vld [vmem:[#allocation7 + $0x80] sm:$0xf]
    %v583 = vld [vmem:[#allocation7 + $0x84] sm:$0xf]
    %v584 = vld [vmem:[#allocation7 + $0x88] sm:$0xf]
    %v585 = vld [vmem:[#allocation7 + $0x8c] sm:$0xf]
    %v586 = vld [vmem:[#allocation7 + $0x90] sm:$0xf]
    %v587 = vld [vmem:[#allocation7 + $0x94] sm:$0xf]
    %v588 = vld [vmem:[#allocation7 + $0x98] sm:$0xf]
    %v589 = vld [vmem:[#allocation7 + $0x9c] sm:$0xf]
    %v590 = vld [vmem:[#allocation7 + $0xa0] sm:$0xf]
    %v591 = vld [vmem:[#allocation7 + $0xa4] sm:$0xf]
    %v592 = vld [vmem:[#allocation7 + $0xa8] sm:$0xf]
    %v593 = vld [vmem:[#allocation7 + $0xac] sm:$0xf]
    %v594 = vld [vmem:[#allocation7 + $0xb0] sm:$0xf]
    %v595 = vld [vmem:[#allocation7 + $0xb4] sm:$0xf]
    %v596 = vld [vmem:[#allocation7 + $0xb8] sm:$0xf]
    %v597 = vld [vmem:[#allocation7 + $0xbc] sm:$0xf]
    %v646 = vunpack.c.l.b16 %v550
    %v647 = vunpack.c.l.b16 %v551
    %v648 = vunpack.c.l.b16 %v552
    %v649 = vunpack.c.l.b16 %v553
    %v650 = vunpack.c.l.b16 %v554
    %v651 = vunpack.c.l.b16 %v555
    %v652 = vunpack.c.l.b16 %v556
    %v653 = vunpack.c.l.b16 %v557
    %v654 = vunpack.c.l.b16 %v558
    %v655 = vunpack.c.l.b16 %v559
    %v656 = vunpack.c.l.b16 %v560
    %v657 = vunpack.c.l.b16 %v561
    %v658 = vunpack.c.l.b16 %v562
    %v659 = vunpack.c.l.b16 %v563
    %v660 = vunpack.c.l.b16 %v564
    %v661 = vunpack.c.l.b16 %v565
    %v662 = vunpack.c.l.b16 %v566
    %v663 = vunpack.c.l.b16 %v567
    %v664 = vunpack.c.l.b16 %v568
    %v665 = vunpack.c.l.b16 %v569
    %v666 = vunpack.c.l.b16 %v570
    %v667 = vunpack.c.l.b16 %v571
    %v668 = vunpack.c.l.b16 %v572
    %v669 = vunpack.c.l.b16 %v573
    %v670 = vunpack.c.l.b16 %v574
    %v671 = vunpack.c.l.b16 %v575
    %v672 = vunpack.c.l.b16 %v576
    %v673 = vunpack.c.l.b16 %v577
    %v674 = vunpack.c.l.b16 %v578
    %v675 = vunpack.c.l.b16 %v579
    %v676 = vunpack.c.l.b16 %v580
    %v677 = vunpack.c.l.b16 %v581
    %v678 = vunpack.c.l.b16 %v582
    %v679 = vunpack.c.l.b16 %v583
    %v680 = vunpack.c.l.b16 %v584
    %v681 = vunpack.c.l.b16 %v585
    %v682 = vunpack.c.l.b16 %v586
    %v683 = vunpack.c.l.b16 %v587
    %v684 = vunpack.c.l.b16 %v588
    %v685 = vunpack.c.l.b16 %v589
    %v686 = vunpack.c.l.b16 %v590
    %v687 = vunpack.c.l.b16 %v591
    %v688 = vunpack.c.l.b16 %v592
    %v689 = vunpack.c.l.b16 %v593
    %v690 = vunpack.c.l.b16 %v594
    %v691 = vunpack.c.l.b16 %v595
    %v692 = vunpack.c.l.b16 %v596
    %v693 = vunpack.c.l.b16 %v597
    %v694 = vpack.c.b16 %v647, %v646
    %v695 = vpack.c.b16 %v649, %v648
    %v696 = vpack.c.b16 %v651, %v650
    %v697 = vpack.c.b16 %v653, %v652
    %v698 = vpack.c.b16 %v655, %v654
    %v699 = vpack.c.b16 %v657, %v656
    %v700 = vpack.c.b16 %v659, %v658
    %v701 = vpack.c.b16 %v661, %v660
    %v702 = vpack.c.b16 %v663, %v662
    %v703 = vpack.c.b16 %v665, %v664
    %v704 = vpack.c.b16 %v667, %v666
    %v705 = vpack.c.b16 %v669, %v668
    %v706 = vpack.c.b16 %v671, %v670
    %v707 = vpack.c.b16 %v673, %v672
    %v708 = vpack.c.b16 %v675, %v674
    %v709 = vpack.c.b16 %v677, %v676
    %v710 = vpack.c.b16 %v679, %v678
    %v711 = vpack.c.b16 %v681, %v680
    %v712 = vpack.c.b16 %v683, %v682
    %v713 = vpack.c.b16 %v685, %v684
    %v714 = vpack.c.b16 %v687, %v686
    %v715 = vpack.c.b16 %v689, %v688
    %v716 = vpack.c.b16 %v691, %v690
    %v717 = vpack.c.b16 %v693, %v692
    %742 = vmatpush.bf16.msra.mxu0 %v701
    %743 = vmatpush.bf16.msra.mxu0 %v700
    %744 = vmatpush.bf16.msra.mxu0 %v699
    %745 = vmatpush.bf16.msra.mxu0 %v698
    %746 = vmatpush.bf16.msra.mxu0 %v697
    %747 = vmatpush.bf16.msra.mxu0 %v696
    %748 = vmatpush.bf16.msra.mxu0 %v695
    %749 = vmatpush.bf16.msra.mxu0 %v694
    %750 = vmatmul.bf16.gmra.mxu0 %v544
    %v751 = vpop.f32.mrf.mxu0
    %v752 = vadd.f32 0.0, %v751
    %v753 = vpop.f32.mrf.mxu0
    %v754 = vadd.f32 0.0, %v753
    %755 = vmatmul.bf16.gmra.mxu0 %v547
    %v756 = vpop.f32.mrf.mxu0
    %v757 = vadd.f32 0.0, %v756
    %v758 = vpop.f32.mrf.mxu0
    %v759 = vadd.f32 0.0, %v758
    %760 = vdwg.mxu0
    %761 = vmatpush.bf16.msra.mxu0 %v709
    %762 = vmatpush.bf16.msra.mxu0 %v708
    %763 = vmatpush.bf16.msra.mxu0 %v707
    %764 = vmatpush.bf16.msra.mxu0 %v706
    %765 = vmatpush.bf16.msra.mxu0 %v705
    %766 = vmatpush.bf16.msra.mxu0 %v704
    %767 = vmatpush.bf16.msra.mxu0 %v703
    %768 = vmatpush.bf16.msra.mxu0 %v702
    %769 = vmatmul.bf16.gmra.mxu0 %v545
    %v770 = vpop.f32.mrf.mxu0
    %v771 = vadd.f32 %v752, %v770
    %v772 = vpop.f32.mrf.mxu0
    %v773 = vadd.f32 %v754, %v772
    %774 = vmatmul.bf16.gmra.mxu0 %v548
    %v775 = vpop.f32.mrf.mxu0
    %v776 = vadd.f32 %v757, %v775
    %v777 = vpop.f32.mrf.mxu0
    %v778 = vadd.f32 %v759, %v777
    %779 = vdwg.mxu0
    %780 = vmatpush.bf16.msra.mxu0 %v717
    %781 = vmatpush.bf16.msra.mxu0 %v716
    %782 = vmatpush.bf16.msra.mxu0 %v715
    %783 = vmatpush.bf16.msra.mxu0 %v714
    %784 = vmatpush.bf16.msra.mxu0 %v713
    %785 = vmatpush.bf16.msra.mxu0 %v712
    %786 = vmatpush.bf16.msra.mxu0 %v711
    %787 = vmatpush.bf16.msra.mxu0 %v710
    %788 = vmatmul.bf16.gmra.mxu0 %v546
    %v789 = vpop.f32.mrf.mxu0
    %v790 = vadd.f32 %v771, %v789
    %v791 = vpop.f32.mrf.mxu0
    %v792 = vadd.f32 %v773, %v791
    %793 = vmatmul.bf16.gmra.mxu0 %v549
    %v794 = vpop.f32.mrf.mxu0
    %v795 = vadd.f32 %v776, %v794
    %v796 = vpop.f32.mrf.mxu0
    %v797 = vadd.f32 %v778, %v796
    %798 = vdwg.mxu0
    %v799 = vld [vmem:[%s5] sm:$0x1]
    %v800 = vld [vmem:[%s6] sm:$0x1]
    %v801 = vadd.f32 %v790, %v792
    %v802 = vadd.f32 %v801, %v795
    %v803 = vadd.f32 %v802, %v797
    %v804 = vrot.slane %v803, 4
    %v805 = vadd.f32 %v803, %v804
    %v806 = vrot.slane %v805, 2
    %v807 = vadd.f32 %v805, %v806
    %v808 = vrot.slane %v807, 1
    %v809 = vadd.f32 %v807, %v808
    %v810 = vmul.f32 %v790, %v790
    %v811 = vmul.f32 %v792, %v792
    %v812 = vmul.f32 %v795, %v795
    %v813 = vmul.f32 %v797, %v797
    %v814 = vadd.f32 %v810, %v811
    %v815 = vadd.f32 %v814, %v812
    %v816 = vadd.f32 %v815, %v813
    %v817 = vrot.slane %v816, 4
    %v818 = vadd.f32 %v816, %v817
    %v819 = vrot.slane %v818, 2
    %v820 = vadd.f32 %v818, %v819
    %v821 = vrot.slane %v820, 1
    %v822 = vadd.f32 %v820, %v821
    %823 = vrot.lane.b32.xlu0 %v809, 8
    %v824 = vpop.permute.xlu0 %823
    %v825 = vadd.f32 %v809, %v824
    %826 = vrot.lane.b32.xlu0 %v825, 16
    %v827 = vpop.permute.xlu0 %826
    %v828 = vadd.f32 %v825, %v827
    %829 = vrot.lane.b32.xlu0 %v828, 32
    %v830 = vpop.permute.xlu0 %829
    %v831 = vadd.f32 %v828, %v830
    %832 = vrot.lane.b32.xlu0 %v831, 64
    %v833 = vpop.permute.xlu0 %832
    %v834 = vadd.f32 %v831, %v833
    %v835 = vmul.f32 %v834, 0.001953125
    %836 = vrot.lane.b32.xlu0 %v822, 8
    %v837 = vpop.permute.xlu0 %836
    %v838 = vadd.f32 %v822, %v837
    %839 = vrot.lane.b32.xlu0 %v838, 16
    %v840 = vpop.permute.xlu0 %839
    %v841 = vadd.f32 %v838, %v840
    %842 = vrot.lane.b32.xlu0 %v841, 32
    %v843 = vpop.permute.xlu0 %842
    %v844 = vadd.f32 %v841, %v843
    %845 = vrot.lane.b32.xlu0 %v844, 64
    %v846 = vpop.permute.xlu0 %845
    %v847 = vadd.f32 %v844, %v846
    %v848 = vmul.f32 %v847, 0.001953125
    %v849 = vmul.f32 %v835, %v835
    %v850 = vsub.f32 %v848, %v849
    %v851 = vadd.f32 %v850, 1e-05
    %v852 = vrsqrt.pop %v851
    %v853 = vmul.f32 %v852, %v851
    %v854 = vmul.f32 %v853, %v852
    %v855 = vmul.f32 0.5, %v854
    %v856 = vsub.f32 1.5, %v855
    %v857 = vmul.f32 %v852, %v856
    %vm858 = vweird.f32 %v851
    %vm859 = vweird.f32 %v852
    %vm860 = vmor %vm858, %vm859
    %v861 = vsel %vm860, %v852, %v857
    %v862 = vmul.f32 %v799, %v861
    %v863 = vmul.f32 %v835, %v862
    %v864 = vsub.f32 %v800, %v863
    %v866 = vperm.slane %v862, 0
    %v868 = vmul.f32 %v790, %v866
    %v869 = vmul.f32 %v792, %v866
    %v870 = vmul.f32 %v795, %v866
    %v871 = vmul.f32 %v797, %v866
    %v873 = vperm.slane %v864, 0
    %v875 = vadd.f32 %v868, %v873
    %v876 = vadd.f32 %v869, %v873
    %v877 = vadd.f32 %v870, %v873
    %v878 = vadd.f32 %v871, %v873
    %v879 = vadd.f32 %v875, %v74
    %v880 = vadd.f32 %v876, %v75
    %v881 = vadd.f32 %v877, %v76
    %v882 = vadd.f32 %v878, %v77
    %v883 = vmax.f32 %v879, 0.0
    %v884 = vmax.f32 %v880, 0.0
    %v885 = vmax.f32 %v881, 0.0
    %v886 = vmax.f32 %v882, 0.0
    %887 = vst [vmem:[#allocation8] sm:$0xff] %v883
    %888 = vst [vmem:[#allocation8 + $0x8] sm:$0xff] %v884
    %889 = vst [vmem:[#allocation8 + $0x10] sm:$0xff] %v885
    %890 = vst [vmem:[#allocation8 + $0x18] sm:$0xff] %v886
    // Predicated region
    $region42: #{tpu_custom_call.1} parent=1 // pred_check
      _
    $region43: #{tpu_custom_call.1} parent=1 // pred_check_branch
      %892 = sbr.rel (0) target = $region45
    $region44: #{tpu_custom_call.1} parent=1 // pred_region
      %894 = vsyncadd [#allocation4], 0
      %s895 = sshll.u32 [#allocation8], 4
      %s896 = int_to_ptr.vmem [resolvable:$true] %s895
      %s897 = sshll.u32 %s7, 4
      %s898 = int_to_ptr.hbm [resolvable:$true] %s897
      %903 = dma.vmem_to_hbm [thread:$0]  %s896, 512, %s898, [#allocation4], 128, 128, 8
    $region45: #{tpu_custom_call.1} parent=1 // pred_fallthru
      _
    // Predicated region
    $region46: #{tpu_custom_call.1} parent=1 // pred_check
      _
    $region47: #{tpu_custom_call.1} parent=1 // pred_check_branch
      %905 = sbr.rel (0) target = $region49
    $region48: #{tpu_custom_call.1} parent=1 // pred_region
      %907 = dma.done [#allocation4], 512
    $region49: #{tpu_custom_call.1} parent=1 // pred_fallthru
      _
    %908 = vsyncpa [#allocation3], 1
    %909 = vsyncpa [#allocation6], 1
    %910 = vsyncpa [#allocation4], 1

</llo_original>
